<compile_context>
chip_gen: v5e
topology: v5e:2x2
jax: 0.10.0
libtpu: 0.0.40
codegen_flags: <defaults>
</compile_context>

<pallas_src>
import jax
import jax.numpy as jnp
from jax import lax
from jax.experimental import pallas as pl
from jax.experimental.pallas import tpu as pltpu


def tied_ae_kernel(x_ref, w_ref, b_ref, inv_ref, xhat_ref, c_ref):
    w = w_ref[...]                                   # (feat_pad, in_f_pad), VMEM-resident
    x = x_ref[...]                                   # (tile_b, in_f_pad)
    inv_wmax = inv_ref[0, 0]                         # scalar 1/max|w| from SMEM

    # Encoder: c = relu((x @ w.T) * s + bias).  Contraction expressed directly
    # (dim 1 of x against dim 1 of w) -> native trans_b MXU matmul, no weight
    # transpose materialized.
    xwT = lax.dot_general(
        x, w,
        dimension_numbers=(((1,), (1,)), ((), ())),
        preferred_element_type=jnp.float32,
    )                                                # (tile_b, feat_pad)
    c = jnp.maximum(xwT * inv_wmax + b_ref[...], 0.0)
    c_ref[...] = c.astype(c_ref.dtype)

    # Decoder (tied weights): x_hat = c @ (w * s).  Apply the scalar to the
    # smaller operand to cut VPU multiplies.
    feat_pad, in_f_pad = w.shape
    if feat_pad <= in_f_pad:
        x_hat = jnp.dot(c * inv_wmax, w, preferred_element_type=jnp.float32)
    else:
        x_hat = jnp.dot(c, w, preferred_element_type=jnp.float32) * inv_wmax
    xhat_ref[...] = x_hat.astype(xhat_ref.dtype)


def _round_up(n, m):
    return ((n + m - 1) // m) * m


def tied_weights_autoencoder(x, weight, bias=None, *, tile_b=None):
    """x: (B, in_features) f32, weight: (feat_dim, in_features) f32,
    bias: (feat_dim,) f32 or None.  Returns (x_hat, c)."""
    B, in_features = x.shape
    feat_dim, _ = weight.shape

    if bias is None:
        bias = jnp.zeros((feat_dim,), dtype=jnp.float32)

    # Scalar normalization factor, computed ONCE outside the grid loop
    # (deferred normalization: scale activations instead of dividing the
    # whole weight).  Same 1/0 failure mode as the PyTorch reference.
    inv_wmax = (1.0 / jnp.max(jnp.abs(weight))).reshape(1, 1).astype(jnp.float32)

    # Lane-density padding: keep the last dim of every block a multiple of 128
    # so output stores are unmasked vst.  Zero-padding is exact: padded weight
    # rows/cols and padded bias entries contribute nothing and are sliced off.
    in_f_pad = _round_up(in_features, 128)
    feat_pad = _round_up(feat_dim, 128)

    w_in = weight.astype(jnp.float32)
    if in_f_pad != in_features or feat_pad != feat_dim:
        w_in = jnp.pad(w_in, ((0, feat_pad - feat_dim), (0, in_f_pad - in_features)))
    b_in = bias.astype(jnp.float32)
    if feat_pad != feat_dim:
        b_in = jnp.pad(b_in, (0, feat_pad - feat_dim))
    bias_2d = b_in.reshape(1, feat_pad)

    x_in = x.astype(jnp.float32)
    if in_f_pad != in_features:
        x_in = jnp.pad(x_in, ((0, 0), (0, in_f_pad - in_features)))

    # Mem-bound regime: take the largest MXU-friendly batch tile available.
    if tile_b is None:
        if B >= 512:
            tile_b = 512
        elif B >= 256:
            tile_b = 256
        elif B >= 128:
            tile_b = 128
        else:
            tile_b = B  # single grid step; block equals the full batch dim

    n_tiles = pl.cdiv(B, tile_b)
    b_pad = n_tiles * tile_b
    if b_pad != B:
        x_in = jnp.pad(x_in, ((0, b_pad - B), (0, 0)))  # padded rows sliced off below

    # VMEM budget: 1x resident weight + bias (single-buffered), 2x
    # (double-buffered) x tile and both output tiles, 2x safety margin.
    # Clamp to [32 MiB, 96 MiB]: lifts v5e's 16 MiB scoped default, stays
    # within v7x's 64 MiB physical VMEM at these shapes.
    itemsize = 4
    vmem_need = itemsize * (
        feat_pad * in_f_pad          # weight (1x, Buffered(1))
        + feat_pad                   # bias
        + 2 * tile_b * in_f_pad      # x in
        + 2 * tile_b * in_f_pad      # x_hat out
        + 2 * tile_b * feat_pad      # c out
    )
    vmem_limit = int(min(max(2 * vmem_need, 32 * 1024 * 1024), 96 * 1024 * 1024))

    x_hat, c = pl.pallas_call(
        tied_ae_kernel,
        out_shape=(
            jax.ShapeDtypeStruct((b_pad, in_f_pad), jnp.float32),
            jax.ShapeDtypeStruct((b_pad, feat_pad), jnp.float32),
        ),
        grid=(n_tiles,),
        in_specs=[
            pl.BlockSpec((tile_b, in_f_pad), lambda i: (i, 0)),
            # Loop-invariant blocks: same block index every step -> stay
            # VMEM-resident; single-buffer them to halve their footprint.
            pl.BlockSpec((feat_pad, in_f_pad), lambda i: (0, 0),
                         pipeline_mode=pl.Buffered(1)),
            pl.BlockSpec((1, feat_pad), lambda i: (0, 0),
                         pipeline_mode=pl.Buffered(1)),
            # Scalar 1/max|w| lives in SMEM (scalar path, no VMEM tile).
            pl.BlockSpec(memory_space=pltpu.MemorySpace.SMEM),
        ],
        out_specs=(
            pl.BlockSpec((tile_b, in_f_pad), lambda i: (i, 0)),
            pl.BlockSpec((tile_b, feat_pad), lambda i: (i, 0)),
        ),
        compiler_params=pltpu.CompilerParams(
            # Batch tiles are independent -> megacore sharding on v7x,
            # plain double-buffered pipelining elsewhere.
            dimension_semantics=("parallel",),
            vmem_limit_bytes=vmem_limit,
        ),
    )(x_in, w_in, bias_2d, inv_wmax)

    # TODO(synk): for very large feat_dim (weight no longer VMEM-resident,
    # esp. under v7x's 64 MiB VMEM) add a trailing "arbitrary" feat_dim grid
    # axis with an f32 accumulator scratch for x_hat; unnecessary at MNIST scale.

    return x_hat[:B, :in_features], c[:B, :feat_dim]


def _reference(x, weight, bias):
    w_n = weight / jnp.max(jnp.abs(weight))
    c_ref = jax.nn.relu(x @ w_n.T + (0.0 if bias is None else bias))
    x_hat_ref = c_ref @ w_n
    return x_hat_ref, c_ref


if __name__ == "__main__":
    key = jax.random.PRNGKey(0)
    k_w, k_b, k_x1, k_x2, k_w3, k_b3, k_x3 = jax.random.split(key, 7)

    in_features = 256
    feat_dim = 128
    sf = 1.0 / jnp.sqrt(jnp.float32(in_features))
    # Deterministic synthetic parameters, matching the module's init ranges.
    weight = sf * (2.0 * jax.random.uniform(k_w, (feat_dim, in_features),
                                            dtype=jnp.float32) - 1.0)
    bias = sf * (2.0 * jax.random.uniform(k_b, (feat_dim,),
                                          dtype=jnp.float32) - 1.0)

    # Case 1: small batch (single grid step).
    x1 = jax.random.normal(k_x1, (8, in_features), dtype=jnp.float32)
    x_hat1, c1 = tied_weights_autoencoder(x1, weight, bias)
    jax.block_until_ready((x_hat1, c1))
    xh_ref1, c_ref1 = _reference(x1, weight, bias)
    assert jnp.allclose(c1, c_ref1, atol=1e-4, rtol=1e-4)
    assert jnp.allclose(x_hat1, xh_ref1, atol=1e-4, rtol=1e-4)

    # Case 2: non-multiple batch with an explicit tile -> exercises the batch
    # grid axis + padding path (resident weight reused across grid steps).
    x2 = jax.random.normal(k_x2, (20, in_features), dtype=jnp.float32)
    x_hat2, c2 = tied_weights_autoencoder(x2, weight, bias, tile_b=8)
    jax.block_until_ready((x_hat2, c2))
    xh_ref2, c_ref2 = _reference(x2, weight, bias)
    assert jnp.allclose(c2, c_ref2, atol=1e-4, rtol=1e-4)
    assert jnp.allclose(x_hat2, xh_ref2, atol=1e-4, rtol=1e-4)

    # Case 3: feature dims that are NOT multiples of 128 -> exercises the
    # lane-density padding path (weight/bias/x zero-padded, outputs sliced).
    in3, feat3 = 200, 72
    sf3 = 1.0 / jnp.sqrt(jnp.float32(in3))
    w3 = sf3 * (2.0 * jax.random.uniform(k_w3, (feat3, in3), dtype=jnp.float32) - 1.0)
    b3 = sf3 * (2.0 * jax.random.uniform(k_b3, (feat3,), dtype=jnp.float32) - 1.0)
    x3 = jax.random.normal(k_x3, (4, in3), dtype=jnp.float32)
    x_hat3, c3 = tied_weights_autoencoder(x3, w3, b3)
    jax.block_until_ready((x_hat3, c3))
    xh_ref3, c_ref3 = _reference(x3, w3, b3)
    assert jnp.allclose(c3, c_ref3, atol=1e-4, rtol=1e-4)
    assert jnp.allclose(x_hat3, xh_ref3, atol=1e-4, rtol=1e-4)

    print("KERNEL_OK")
</pallas_src>

<mosaic_0001>
module attributes {stable_mosaic.version = 11 : i64} {
  func.func @tied_ae_kernel(%arg0: i32, %arg1: memref<8x256xf32, #tpu.memory_space<vmem>>, %arg2: memref<128x256xf32, #tpu.memory_space<vmem>>, %arg3: memref<1x128xf32, #tpu.memory_space<vmem>>, %arg4: memref<1x1xf32, #tpu.memory_space<smem>>, %arg5: memref<8x256xf32, #tpu.memory_space<vmem>>, %arg6: memref<8x128xf32, #tpu.memory_space<vmem>>) attributes {dimension_semantics = [#tpu.dimension_semantics<parallel>], iteration_bounds = array<i64: 1>, scalar_prefetch = 0 : i64, scratch_operands = 0 : i64, tpu.core_type = #tpu.core_type<tc>, window_params = [{transform_indices = @transform_0, window_bounds = array<i64: 8, 256>}, {pipeline_mode = #tpu.pipeline_mode<synchronous>, transform_indices = @transform_1, window_bounds = array<i64: 128, 256>}, {pipeline_mode = #tpu.pipeline_mode<synchronous>, transform_indices = @transform_2, window_bounds = array<i64: 1, 128>}, {transform_indices = @transform_3, window_bounds = array<i64: 1, 1>}, {transform_indices = @transform_4, window_bounds = array<i64: 8, 256>}, {transform_indices = @transform_5, window_bounds = array<i64: 8, 128>}]} {
    %c0 = arith.constant 0 : index
    %c0_0 = arith.constant 0 : index
    %0 = vector.load %arg2[%c0, %c0_0] : memref<128x256xf32, #tpu.memory_space<vmem>>, vector<128x256xf32>
    %c0_1 = arith.constant 0 : index
    %c0_2 = arith.constant 0 : index
    %1 = vector.load %arg1[%c0_1, %c0_2] : memref<8x256xf32, #tpu.memory_space<vmem>>, vector<8x256xf32>
    %c0_3 = arith.constant 0 : index
    %c0_4 = arith.constant 0 : index
    %2 = memref.load %arg4[%c0_3, %c0_4] : memref<1x1xf32, #tpu.memory_space<smem>>
    %cst = arith.constant dense<0.000000e+00> : vector<8x128xf32>
    %3 = tpu.matmul %1, %0, %cst {dimension_numbers = #tpu.dot_dimension_numbers<[1], [1], [0], [0], [0, 0, 1, 0], [], []>} : vector<8x256xf32>, vector<128x256xf32>, vector<8x128xf32> -> vector<8x128xf32>
    %4 = vector.broadcast %2 : f32 to vector<8x128xf32>
    %5 = arith.mulf %3, %4 : vector<8x128xf32>
    %c0_5 = arith.constant 0 : index
    %c0_6 = arith.constant 0 : index
    %6 = vector.load %arg3[%c0_5, %c0_6] : memref<1x128xf32, #tpu.memory_space<vmem>>, vector<1x128xf32>
    %7 = vector.broadcast %6 : vector<1x128xf32> to vector<8x128xf32>
    %8 = arith.addf %5, %7 : vector<8x128xf32>
    %cst_7 = arith.constant 0.000000e+00 : f32
    %9 = vector.broadcast %cst_7 : f32 to vector<8x128xf32>
    %10 = arith.maximumf %8, %9 : vector<8x128xf32>
    %c0_8 = arith.constant 0 : index
    %c0_9 = arith.constant 0 : index
    %11 = vector.load %arg6[%c0_8, %c0_9] : memref<8x128xf32, #tpu.memory_space<vmem>>, vector<8x128xf32>
    tpu.vector_store %arg6[%c0_8, %c0_9], %10 {strides = array<i32>} : memref<8x128xf32, #tpu.memory_space<vmem>>, vector<8x128xf32>,
    %12 = vector.broadcast %2 : f32 to vector<8x128xf32>
    %13 = arith.mulf %10, %12 : vector<8x128xf32>
    %cst_10 = arith.constant dense<0.000000e+00> : vector<8x256xf32>
    %14 = tpu.matmul %13, %0, %cst_10 {dimension_numbers = #tpu.dot_dimension_numbers<[1], [0], [0], [1], [0, 0, 1, 1], [], []>} : vector<8x128xf32>, vector<128x256xf32>, vector<8x256xf32> -> vector<8x256xf32>
    %c0_11 = arith.constant 0 : index
    %c0_12 = arith.constant 0 : index
    %15 = vector.load %arg5[%c0_11, %c0_12] : memref<8x256xf32, #tpu.memory_space<vmem>>, vector<8x256xf32>
    tpu.vector_store %arg5[%c0_11, %c0_12], %14 {strides = array<i32>} : memref<8x256xf32, #tpu.memory_space<vmem>>, vector<8x256xf32>,
    return
  }
  func.func @transform_0(%arg0: i32) -> (i32, i32) {
    %c0_i32 = arith.constant 0 : i32
    %c0_i32_0 = arith.constant 0 : i32
    return %arg0, %c0_i32 : i32, i32
  }
  func.func @transform_1(%arg0: i32) -> (i32, i32) {
    %c0_i32 = arith.constant 0 : i32
    %c0_i32_0 = arith.constant 0 : i32
    %c0_i32_1 = arith.constant 0 : i32
    return %c0_i32, %c0_i32_0 : i32, i32
  }
  func.func @transform_2(%arg0: i32) -> (i32, i32) {
    %c0_i32 = arith.constant 0 : i32
    %c0_i32_0 = arith.constant 0 : i32
    %c0_i32_1 = arith.constant 0 : i32
    return %c0_i32, %c0_i32_0 : i32, i32
  }
  func.func @transform_3(%arg0: i32) -> (i32, i32) {
    %c0_i32 = arith.constant 0 : i32
    %c0_i32_0 = arith.constant 0 : i32
    %c0_i32_1 = arith.constant 0 : i32
    return %c0_i32, %c0_i32_0 : i32, i32
  }
  func.func @transform_4(%arg0: i32) -> (i32, i32) {
    %c0_i32 = arith.constant 0 : i32
    %c0_i32_0 = arith.constant 0 : i32
    return %arg0, %c0_i32 : i32, i32
  }
  func.func @transform_5(%arg0: i32) -> (i32, i32) {
    %c0_i32 = arith.constant 0 : i32
    %c0_i32_0 = arith.constant 0 : i32
    return %arg0, %c0_i32 : i32, i32
  }
}

</mosaic_0001>

<llo_original>
// kernel: tpu_custom_call.1
$region0: #{tpu_custom_call.1}
  #allocation0 [shape = 'u32[]', space=smem, size = 0x4, offset = 0x4, fixed_abs, tag = 'smem constant byte address 0x4 - core index']
  #allocation1 [shape = 'u32[72,128]{1,0:T(1,128)}', space=vmem, size = 0x9000, scoped, tag = 'internal scratch']
  #allocation2 [shape = 'f32[1,1]{1,0:T(1,128)S(6)}', space=smem, size = 0x200, scoped, tag = 'scoped memory for tpu_custom_call.1']
  %s0 = inlined_call_operand.hbm [shape: f32[8,256], index: 0, kind: input, shape index: {}]
  %s1 = inlined_call_operand.hbm [shape: f32[128,256], index: 1, kind: input, shape index: {}]
  %s2 = inlined_call_operand.vmem [shape: f32[1,128], index: 2, kind: input, shape index: {}]
  %s3 = inlined_call_operand.<no memory space> [shape: f32[1,1], index: 3, kind: input, shape index: {}]
  %s4 = inlined_call_operand.hbm [shape: f32[8,256], index: 4, kind: output, shape index: {0}]
  %s5 = inlined_call_operand.hbm [shape: f32[8,128], index: 5, kind: output, shape index: {1}]
  %6 = xla_tuple %s4, %s5
  %s7 = sld [smem:[#allocation0]]
  $region42: #{tpu_custom_call.1} parent=0
    _
  %s9 = ssub.s32 1, %s7
  %s10 = scalar_select 0, %s9, %s7
  %11 = sst [smem:[#allocation2]] %s3
  $region1: #{tpu_custom_call.1} parent=0
    #allocation3 [shape = 'u8[8192]{0}', space=vmem, size = 0x2000, scoped, tag = 'input window, operand 0, single buffered']
    #allocation4 [shape = 's32[1]{0}', space=sflag, size = 0x4, scoped, tag = 'scoped memory for tpu_custom_call.1']
    #allocation5 [shape = 's32[1]{0}', space=sflag, size = 0x4, scoped, tag = 'scoped memory for tpu_custom_call.1']
    #allocation6 [shape = 'u8[131072]{0}', space=vmem, size = 0x20000, scoped, tag = 'input window, operand 1, single buffered']
    #allocation7 [shape = 's32[1]{0}', space=sflag, size = 0x4, scoped, tag = 'scoped memory for tpu_custom_call.1']
    #allocation8 [shape = 'u8[8192]{0}', space=vmem, size = 0x2000, scoped, tag = 'output window, operand 0, single buffered']
    #allocation9 [shape = 'u8[4096]{0}', space=vmem, size = 0x1000, scoped, tag = 'output window, operand 1, single buffered']
    #allocation10 [shape = 's32[1]{0}', space=sflag, size = 0x4, scoped, tag = 'scoped memory for tpu_custom_call.1']
    %12 = vsyncpa [#allocation4], 0
    %13 = vsyncpa [#allocation7], 0
    %14 = vsyncpa [#allocation5], 0
    %15 = vsyncpa [#allocation10], 0
    // Predicated region
    $region2: #{tpu_custom_call.1} parent=1 // pred_check
      _
    $region3: #{tpu_custom_call.1} parent=1 // pred_check_branch
      %17 = sbr.rel (0) target = $region5
    $region4: #{tpu_custom_call.1} parent=1 // pred_region
      %19 = vsyncadd [#allocation4], 0
      %s21 = sshll.u32 %s0, 4
      %s22 = int_to_ptr.hbm [resolvable:$true] %s21
      %s23 = sshll.u32 [#allocation3], 4
      %s24 = int_to_ptr.vmem [resolvable:$true] %s23
      %26 = dma.hbm_to_vmem [thread:$0]  %s22, 256, %s24, [#allocation4]
    $region5: #{tpu_custom_call.1} parent=1 // pred_fallthru
      _
    // Predicated region
    $region6: #{tpu_custom_call.1} parent=1 // pred_check
      _
    $region7: #{tpu_custom_call.1} parent=1 // pred_check_branch
      %28 = sbr.rel (0) target = $region9
    $region8: #{tpu_custom_call.1} parent=1 // pred_region
      %30 = vsyncadd [#allocation7], 0
      %s31 = sshll.u32 %s1, 4
      %s32 = int_to_ptr.hbm [resolvable:$true] %s31
      %s33 = sshll.u32 [#allocation6], 4
      %s34 = int_to_ptr.vmem [resolvable:$true] %s33
      %39 = dma.hbm_to_vmem [thread:$0]  %s32, 4096, %s34, [#allocation7], 256, 256, 16
    $region9: #{tpu_custom_call.1} parent=1 // pred_fallthru
      _
    // Predicated region
    $region10: #{tpu_custom_call.1} parent=1 // pred_check
      _
    $region11: #{tpu_custom_call.1} parent=1 // pred_check_branch
      %41 = sbr.rel (0) target = $region13
    $region12: #{tpu_custom_call.1} parent=1 // pred_region
      _
    $region13: #{tpu_custom_call.1} parent=1 // pred_fallthru
      _
    // Predicated region
    $region14: #{tpu_custom_call.1} parent=1 // pred_check
      _
    $region15: #{tpu_custom_call.1} parent=1 // pred_check_branch
      %43 = sbr.rel (0) target = $region17
    $region16: #{tpu_custom_call.1} parent=1 // pred_region
      _
    $region17: #{tpu_custom_call.1} parent=1 // pred_fallthru
      _
    // Predicated region
    $region18: #{tpu_custom_call.1} parent=1 // pred_check
      _
    $region19: #{tpu_custom_call.1} parent=1 // pred_check_branch
      %45 = sbr.rel (0) target = $region21
    $region20: #{tpu_custom_call.1} parent=1 // pred_region
      %47 = dma.done [#allocation4], 256
    $region21: #{tpu_custom_call.1} parent=1 // pred_fallthru
      _
    // Predicated region
    $region22: #{tpu_custom_call.1} parent=1 // pred_check
      _
    $region23: #{tpu_custom_call.1} parent=1 // pred_check_branch
      %49 = sbr.rel (0) target = $region25
    $region24: #{tpu_custom_call.1} parent=1 // pred_region
      %51 = dma.done [#allocation7], 4096
    $region25: #{tpu_custom_call.1} parent=1 // pred_fallthru
      _
    %v52 = vld [vmem:[#allocation6] sm:$0xff]
    %v53 = vld [vmem:[#allocation6 + $0x8] sm:$0xff]
    %v54 = vld [vmem:[#allocation6 + $0x10] sm:$0xff]
    %v55 = vld [vmem:[#allocation6 + $0x18] sm:$0xff]
    %v56 = vld [vmem:[#allocation6 + $0x20] sm:$0xff]
    %v57 = vld [vmem:[#allocation6 + $0x28] sm:$0xff]
    %v58 = vld [vmem:[#allocation6 + $0x30] sm:$0xff]
    %v59 = vld [vmem:[#allocation6 + $0x38] sm:$0xff]
    %v60 = vld [vmem:[#allocation6 + $0x40] sm:$0xff]
    %v61 = vld [vmem:[#allocation6 + $0x48] sm:$0xff]
    %v62 = vld [vmem:[#allocation6 + $0x50] sm:$0xff]
    %v63 = vld [vmem:[#allocation6 + $0x58] sm:$0xff]
    %v64 = vld [vmem:[#allocation6 + $0x60] sm:$0xff]
    %v65 = vld [vmem:[#allocation6 + $0x68] sm:$0xff]
    %v66 = vld [vmem:[#allocation6 + $0x70] sm:$0xff]
    %v67 = vld [vmem:[#allocation6 + $0x78] sm:$0xff]
    %v68 = vld [vmem:[#allocation6 + $0x80] sm:$0xff]
    %v69 = vld [vmem:[#allocation6 + $0x88] sm:$0xff]
    %v70 = vld [vmem:[#allocation6 + $0x90] sm:$0xff]
    %v71 = vld [vmem:[#allocation6 + $0x98] sm:$0xff]
    %v72 = vld [vmem:[#allocation6 + $0xa0] sm:$0xff]
    %v73 = vld [vmem:[#allocation6 + $0xa8] sm:$0xff]
    %v74 = vld [vmem:[#allocation6 + $0xb0] sm:$0xff]
    %v75 = vld [vmem:[#allocation6 + $0xb8] sm:$0xff]
    %v76 = vld [vmem:[#allocation6 + $0xc0] sm:$0xff]
    %v77 = vld [vmem:[#allocation6 + $0xc8] sm:$0xff]
    %v78 = vld [vmem:[#allocation6 + $0xd0] sm:$0xff]
    %v79 = vld [vmem:[#allocation6 + $0xd8] sm:$0xff]
    %v80 = vld [vmem:[#allocation6 + $0xe0] sm:$0xff]
    %v81 = vld [vmem:[#allocation6 + $0xe8] sm:$0xff]
    %v82 = vld [vmem:[#allocation6 + $0xf0] sm:$0xff]
    %v83 = vld [vmem:[#allocation6 + $0xf8] sm:$0xff]
    %v84 = vld [vmem:[#allocation3] sm:$0xff]
    %v85 = vld [vmem:[#allocation3 + $0x8] sm:$0xff]
    %s86 = sld [smem:[#allocation2]]
    %87 = vmatpush.xpose.msra.mxu0 %v82
    %88 = vmatpush.xpose.msra.mxu0 %v80
    %89 = vmatpush.xpose.msra.mxu0 %v78
    %90 = vmatpush.xpose.msra.mxu0 %v76
    %91 = vmatpush.xpose.msra.mxu0 %v74
    %92 = vmatpush.xpose.msra.mxu0 %v72
    %93 = vmatpush.xpose.msra.mxu0 %v70
    %94 = vmatpush.xpose.msra.mxu0 %v68
    %95 = vmatpush.xpose.msra.mxu0 %v66
    %96 = vmatpush.xpose.msra.mxu0 %v64
    %97 = vmatpush.xpose.msra.mxu0 %v62
    %98 = vmatpush.xpose.msra.mxu0 %v60
    %99 = vmatpush.xpose.msra.mxu0 %v58
    %100 = vmatpush.xpose.msra.mxu0 %v56
    %101 = vmatpush.xpose.msra.mxu0 %v54
    %102 = vmatpush.xpose.msra.mxu0 %v52
    %103 = vmatmul.f32.gmra.mxu0 %v84
    %v104 = vpop.f32.mrf.mxu0
    %v105 = vadd.f32 0.0, %v104
    %106 = vdwg.mxu0
    %107 = vmatpush.xpose.msra.mxu0 %v83
    %108 = vmatpush.xpose.msra.mxu0 %v81
    %109 = vmatpush.xpose.msra.mxu0 %v79
    %110 = vmatpush.xpose.msra.mxu0 %v77
    %111 = vmatpush.xpose.msra.mxu0 %v75
    %112 = vmatpush.xpose.msra.mxu0 %v73
    %113 = vmatpush.xpose.msra.mxu0 %v71
    %114 = vmatpush.xpose.msra.mxu0 %v69
    %115 = vmatpush.xpose.msra.mxu0 %v67
    %116 = vmatpush.xpose.msra.mxu0 %v65
    %117 = vmatpush.xpose.msra.mxu0 %v63
    %118 = vmatpush.xpose.msra.mxu0 %v61
    %119 = vmatpush.xpose.msra.mxu0 %v59
    %120 = vmatpush.xpose.msra.mxu0 %v57
    %121 = vmatpush.xpose.msra.mxu0 %v55
    %122 = vmatpush.xpose.msra.mxu0 %v53
    %123 = vmatmul.f32.gmra.mxu0 %v85
    %v124 = vpop.f32.mrf.mxu0
    %v125 = vadd.f32 %v105, %v124
    %126 = vdwg.mxu0
    %v127 = vstv %s86
    %v128 = vmul.f32 %v125, %v127
    %v129 = vld [vmem:[%s2] sm:$0x1]
    %v131 = vperm.slane %v129, 0
    %v133 = vadd.f32 %v128, %v131
    %v134 = vmax.f32 %v133, 0.0
    %135 = vst [vmem:[#allocation9] sm:$0xff] %v134
    %v136 = vmul.f32 %v134, %v127
    %137 = vmatpush.msra.mxu0 %v82
    %138 = vmatpush.msra.mxu0 %v80
    %139 = vmatpush.msra.mxu0 %v78
    %140 = vmatpush.msra.mxu0 %v76
    %141 = vmatpush.msra.mxu0 %v74
    %142 = vmatpush.msra.mxu0 %v72
    %143 = vmatpush.msra.mxu0 %v70
    %144 = vmatpush.msra.mxu0 %v68
    %145 = vmatpush.msra.mxu0 %v66
    %146 = vmatpush.msra.mxu0 %v64
    %147 = vmatpush.msra.mxu0 %v62
    %148 = vmatpush.msra.mxu0 %v60
    %149 = vmatpush.msra.mxu0 %v58
    %150 = vmatpush.msra.mxu0 %v56
    %151 = vmatpush.msra.mxu0 %v54
    %152 = vmatpush.msra.mxu0 %v52
    %153 = vmatmul.f32.gmra.mxu0 %v136
    %v154 = vpop.f32.mrf.mxu0
    %v155 = vadd.f32 0.0, %v154
    %156 = vdwg.mxu0
    %157 = vmatpush.msra.mxu0 %v83
    %158 = vmatpush.msra.mxu0 %v81
    %159 = vmatpush.msra.mxu0 %v79
    %160 = vmatpush.msra.mxu0 %v77
    %161 = vmatpush.msra.mxu0 %v75
    %162 = vmatpush.msra.mxu0 %v73
    %163 = vmatpush.msra.mxu0 %v71
    %164 = vmatpush.msra.mxu0 %v69
    %165 = vmatpush.msra.mxu0 %v67
    %166 = vmatpush.msra.mxu0 %v65
    %167 = vmatpush.msra.mxu0 %v63
    %168 = vmatpush.msra.mxu0 %v61
    %169 = vmatpush.msra.mxu0 %v59
    %170 = vmatpush.msra.mxu0 %v57
    %171 = vmatpush.msra.mxu0 %v55
    %172 = vmatpush.msra.mxu0 %v53
    %173 = vmatmul.f32.gmra.mxu0 %v136
    %v174 = vpop.f32.mrf.mxu0
    %v175 = vadd.f32 0.0, %v174
    %176 = vdwg.mxu0
    %177 = vst [vmem:[#allocation8] sm:$0xff] %v155
    %178 = vst [vmem:[#allocation8 + $0x8] sm:$0xff] %v175
    // Predicated region
    $region26: #{tpu_custom_call.1} parent=1 // pred_check
      _
    $region27: #{tpu_custom_call.1} parent=1 // pred_check_branch
      %180 = sbr.rel (0) target = $region29
    $region28: #{tpu_custom_call.1} parent=1 // pred_region
      %182 = vsyncadd [#allocation5], 0
      %s184 = sshll.u32 [#allocation8], 4
      %s185 = int_to_ptr.vmem [resolvable:$true] %s184
      %s186 = sshll.u32 %s4, 4
      %s187 = int_to_ptr.hbm [resolvable:$true] %s186
      %189 = dma.vmem_to_hbm [thread:$0]  %s185, 256, %s187, [#allocation5]
    $region29: #{tpu_custom_call.1} parent=1 // pred_fallthru
      _
    // Predicated region
    $region30: #{tpu_custom_call.1} parent=1 // pred_check
      _
    $region31: #{tpu_custom_call.1} parent=1 // pred_check_branch
      %191 = sbr.rel (0) target = $region33
    $region32: #{tpu_custom_call.1} parent=1 // pred_region
      %193 = vsyncadd [#allocation10], 0
      %s195 = sshll.u32 [#allocation9], 4
      %s196 = int_to_ptr.vmem [resolvable:$true] %s195
      %s197 = sshll.u32 %s5, 4
      %s198 = int_to_ptr.hbm [resolvable:$true] %s197
      %200 = dma.vmem_to_hbm [thread:$0]  %s196, 128, %s198, [#allocation10]
    $region33: #{tpu_custom_call.1} parent=1 // pred_fallthru
      _
    // Predicated region
    $region34: #{tpu_custom_call.1} parent=1 // pred_check
      _
    $region35: #{tpu_custom_call.1} parent=1 // pred_check_branch
      %202 = sbr.rel (0) target = $region37
    $region36: #{tpu_custom_call.1} parent=1 // pred_region
      %204 = dma.done [#allocation5], 256
    $region37: #{tpu_custom_call.1} parent=1 // pred_fallthru
      _
    // Predicated region
    $region38: #{tpu_custom_call.1} parent=1 // pred_check
      _
    $region39: #{tpu_custom_call.1} parent=1 // pred_check_branch
      %206 = sbr.rel (0) target = $region41
    $region40: #{tpu_custom_call.1} parent=1 // pred_region
      %208 = dma.done [#allocation10], 128
    $region41: #{tpu_custom_call.1} parent=1 // pred_fallthru
      _
    %209 = vsyncpa [#allocation4], 1
    %210 = vsyncpa [#allocation7], 1
    %211 = vsyncpa [#allocation5], 1
    %212 = vsyncpa [#allocation10], 1

</llo_original>
